<compile_context>
chip_gen: v7x
topology: tpu7x:2x2x1
jax: 0.10.0
libtpu: 0.0.40
codegen_flags: <defaults>
</compile_context>

<pallas_src>
import functools

import jax
import jax.numpy as jnp
from jax import lax
from jax.experimental import pallas as pl
from jax.experimental.pallas import tpu as pltpu

IN_FEATURES = 150
OUT_FEATURES = 3


def _round_up(n, m):
    return ((n + m - 1) // m) * m


@functools.lru_cache(maxsize=1)
def _default_tile_b():
    """Generation-tuned batch tile (rows of x per grid step)."""
    try:
        kind = jax.devices()[0].device_kind.lower()
    except Exception:  # pragma: no cover - conservative fallback
        return 4096
    if "v7" in kind:
        return 16384   # ~50 MiB double-buffered, needs raised vmem limit
    if "v6" in kind:
        return 8192    # ~26 MiB double-buffered, fits 32 MiB scoped default
    if "v5p" in kind:
        return 8192
    return 4096        # v5e (~14 MiB, fits its 16 MiB default) / unknown


def _vmem_limit_bytes(tb):
    """Estimate scoped-VMEM need for a tile of tb rows (lane-padded, 2-buffered).

    x block: tb x 256 lanes x 4 B per buffer; out block: tb x 128 lanes x 4 B
    per buffer; weight/bias/headroom ~2 MiB.  Only returns a raised limit when
    the estimate exceeds the 32 MiB scoped default (capped at 56 MiB, safely
    under v7x's 64 MiB/TC physical VMEM).
    """
    need = tb * (256 * 4 + 128 * 4) * 2 + (2 << 20)
    if need <= (32 << 20):
        return None
    return min(need, 56 << 20)


def linear_kernel(x_ref, w_ref, b_ref, o_ref):
    # x_ref: (TILE_B, 150)  w_ref: (3, 150) f32  b_ref: (1, 3) f32
    # o_ref: (TILE_B, 3) f32
    x = x_ref[...]
    w = w_ref[...].astype(x.dtype)  # f32 path stays f32; bf16 x -> bf16 MXU
    # out[b, o] = sum_k x[b, k] * w[o, k]  (contract last dims of both), f32 acc.
    acc = lax.dot_general(
        x, w,
        dimension_numbers=(((1,), (1,)), ((), ())),
        preferred_element_type=jnp.float32,
    )
    o_ref[...] = (acc + b_ref[...]).astype(o_ref.dtype)


def prepare_params(weight, bias):
    """One-time parameter prep (hoisted out of the per-call wrapper).

    weight: (3, 150) PyTorch nn.Linear layout, kept f32 (tiny, VMEM-resident;
            cast to the input dtype inside the kernel if x is bf16).
    bias:   (3,) -> (1, 3) f32 so it lives as a 2-D VMEM tile.
    """
    w = jnp.asarray(weight).astype(jnp.float32)
    b = jnp.asarray(bias).astype(jnp.float32).reshape(1, OUT_FEATURES)
    return w, b


def my_first_net_forward(x, weight_prepped, bias2d, *, tile_b=None):
    """Equivalent of MyFirstNet.forward: x @ W.T + b for nn.Linear(150, 3).

    Args:
      x:              (B, 150) float32 or bfloat16 (take bf16 straight from
                      the producer to halve HBM traffic — do NOT cast here).
      weight_prepped: (3, 150) float32, from prepare_params
      bias2d:         (1, 3)   float32, from prepare_params
    Returns:
      (B, 3) float32
    """
    B = x.shape[0]
    if tile_b is None:
        tile_b = _default_tile_b()

    # Effective tile: multiple of 8 (sublane granularity), no larger than the
    # (8-rounded) batch so tiny batches don't DMA a huge mostly-padding block.
    tb = min(tile_b, _round_up(B, 8))
    tb = _round_up(tb, 8)

    grid = (pl.cdiv(B, tb),)  # ragged last block masked by Pallas — no host pad

    vmem_limit = _vmem_limit_bytes(tb)
    cp_kwargs = dict(dimension_semantics=("parallel",))
    if vmem_limit is not None:
        cp_kwargs["vmem_limit_bytes"] = int(vmem_limit)

    out = pl.pallas_call(
        linear_kernel,
        out_shape=jax.ShapeDtypeStruct((B, OUT_FEATURES), jnp.float32),
        grid=grid,
        in_specs=[
            # Streamed: a new batch tile of x per grid step (double-buffered).
            pl.BlockSpec((tb, IN_FEATURES), lambda i: (i, 0)),
            # VMEM-resident across the whole grid.
            pl.BlockSpec((OUT_FEATURES, IN_FEATURES), lambda i: (0, 0)),
            pl.BlockSpec((1, OUT_FEATURES), lambda i: (0, 0)),
        ],
        out_specs=pl.BlockSpec((tb, OUT_FEATURES), lambda i: (i, 0)),
        compiler_params=pltpu.CompilerParams(**cp_kwargs),
    )(x, weight_prepped, bias2d)

    return out


def _check_f32(x, weight_f32, bias_f32, out, atol):
    # Exact f32 reference (the kernel keeps f32 inputs on the f32 MXU path).
    ref = x.astype(jnp.float32) @ weight_f32.T + bias_f32
    assert out.shape == (x.shape[0], OUT_FEATURES)
    err = float(jnp.max(jnp.abs(out - ref)))
    assert jnp.allclose(out, ref, atol=atol, rtol=atol), err


def _check_bf16(x_bf16, weight_f32, bias_f32, out, atol):
    # Reference with the same bf16 rounding as the kernel's bf16 input path.
    xb = x_bf16.astype(jnp.float32)
    wb = weight_f32.astype(jnp.bfloat16).astype(jnp.float32)
    ref = xb @ wb.T + bias_f32
    assert out.shape == (x_bf16.shape[0], OUT_FEATURES)
    err = float(jnp.max(jnp.abs(out - ref)))
    assert jnp.allclose(out, ref, atol=atol, rtol=atol), err


if __name__ == "__main__":
    key = jax.random.PRNGKey(0)
    k_x, k_w, k_b, k_x2, k_x3 = jax.random.split(key, 5)

    # Deterministic params mimicking nn.Linear's U(-1/sqrt(in), 1/sqrt(in)).
    bound = 1.0 / (IN_FEATURES ** 0.5)
    weight = jax.random.uniform(
        k_w, (OUT_FEATURES, IN_FEATURES), minval=-bound, maxval=bound,
        dtype=jnp.float32)
    bias = jax.random.uniform(
        k_b, (OUT_FEATURES,), minval=-bound, maxval=bound, dtype=jnp.float32)
    w_prep, b_prep = prepare_params(weight, bias)  # hoisted out of forward

    # Small example consistent with nn.Linear(150, 3): batch=8, f32 input.
    B = 8
    x = jax.random.normal(k_x, (B, IN_FEATURES), dtype=jnp.float32)
    out = jax.block_until_ready(my_first_net_forward(x, w_prep, b_prep))
    _check_f32(x, weight, bias, out, atol=1e-4)

    # Multi-tile + ragged last block (no host padding): B=300 with 128-row
    # tiles -> 3 grid steps, last one masked by Pallas.
    B2 = 300
    x2 = jax.random.normal(k_x2, (B2, IN_FEATURES), dtype=jnp.float32)
    out2 = jax.block_until_ready(
        my_first_net_forward(x2, w_prep, b_prep, tile_b=128))
    _check_f32(x2, weight, bias, out2, atol=1e-4)

    # bf16-producer path (halves HBM bytes/row on this bandwidth-bound kernel).
    B3 = 64
    x3 = jax.random.normal(k_x3, (B3, IN_FEATURES), dtype=jnp.float32
                           ).astype(jnp.bfloat16)
    out3 = jax.block_until_ready(my_first_net_forward(x3, w_prep, b_prep))
    _check_bf16(x3, weight, bias, out3, atol=1e-3)

    print("KERNEL_OK")
</pallas_src>

<mosaic_0001>
module attributes {stable_mosaic.version = 11 : i64} {
  func.func @linear_kernel(%arg0: i32, %arg1: memref<8x150xf32, #tpu.memory_space<vmem>>, %arg2: memref<3x150xf32, #tpu.memory_space<vmem>>, %arg3: memref<1x3xf32, #tpu.memory_space<vmem>>, %arg4: memref<8x3xf32, #tpu.memory_space<vmem>>) attributes {dimension_semantics = [#tpu.dimension_semantics<parallel>], iteration_bounds = array<i64: 1>, scalar_prefetch = 0 : i64, scratch_operands = 0 : i64, tpu.core_type = #tpu.core_type<tc>, window_params = [{transform_indices = @transform_0, window_bounds = array<i64: 8, 150>}, {pipeline_mode = #tpu.pipeline_mode<synchronous>, transform_indices = @transform_1, window_bounds = array<i64: 3, 150>}, {pipeline_mode = #tpu.pipeline_mode<synchronous>, transform_indices = @transform_2, window_bounds = array<i64: 1, 3>}, {transform_indices = @transform_3, window_bounds = array<i64: 8, 3>}]} {
    %c0 = arith.constant 0 : index
    %c0_0 = arith.constant 0 : index
    %0 = vector.load %arg1[%c0, %c0_0] : memref<8x150xf32, #tpu.memory_space<vmem>>, vector<8x150xf32>
    %c0_1 = arith.constant 0 : index
    %c0_2 = arith.constant 0 : index
    %1 = vector.load %arg2[%c0_1, %c0_2] : memref<3x150xf32, #tpu.memory_space<vmem>>, vector<3x150xf32>
    %cst = arith.constant dense<0.000000e+00> : vector<8x3xf32>
    %2 = tpu.matmul %0, %1, %cst {dimension_numbers = #tpu.dot_dimension_numbers<[1], [1], [0], [0], [0, 0, 1, 0], [], []>} : vector<8x150xf32>, vector<3x150xf32>, vector<8x3xf32> -> vector<8x3xf32>
    %c0_3 = arith.constant 0 : index
    %c0_4 = arith.constant 0 : index
    %3 = vector.load %arg3[%c0_3, %c0_4] : memref<1x3xf32, #tpu.memory_space<vmem>>, vector<1x3xf32>
    %4 = vector.broadcast %3 : vector<1x3xf32> to vector<8x3xf32>
    %5 = arith.addf %2, %4 : vector<8x3xf32>
    %c0_5 = arith.constant 0 : index
    %c0_6 = arith.constant 0 : index
    %6 = vector.load %arg4[%c0_5, %c0_6] : memref<8x3xf32, #tpu.memory_space<vmem>>, vector<8x3xf32>
    tpu.vector_store %arg4[%c0_5, %c0_6], %5 {strides = array<i32>} : memref<8x3xf32, #tpu.memory_space<vmem>>, vector<8x3xf32>,
    return
  }
  func.func @transform_0(%arg0: i32) -> (i32, i32) {
    %c0_i32 = arith.constant 0 : i32
    %c0_i32_0 = arith.constant 0 : i32
    return %arg0, %c0_i32 : i32, i32
  }
  func.func @transform_1(%arg0: i32) -> (i32, i32) {
    %c0_i32 = arith.constant 0 : i32
    %c0_i32_0 = arith.constant 0 : i32
    %c0_i32_1 = arith.constant 0 : i32
    return %c0_i32, %c0_i32_0 : i32, i32
  }
  func.func @transform_2(%arg0: i32) -> (i32, i32) {
    %c0_i32 = arith.constant 0 : i32
    %c0_i32_0 = arith.constant 0 : i32
    %c0_i32_1 = arith.constant 0 : i32
    return %c0_i32, %c0_i32_0 : i32, i32
  }
  func.func @transform_3(%arg0: i32) -> (i32, i32) {
    %c0_i32 = arith.constant 0 : i32
    %c0_i32_0 = arith.constant 0 : i32
    return %arg0, %c0_i32 : i32, i32
  }
}

</mosaic_0001>

<llo_original>
// kernel: tpu_custom_call.1
$region0: #{tpu_custom_call.1}
  #allocation0 [shape = 'u32[]', space=smem, size = 0x4, offset = 0x4, fixed_abs, tag = 'smem constant byte address 0x4 - core index']
  #allocation1 [shape = 'u32[144,128]{1,0:T(1,128)}', space=vmem, size = 0x12000, scoped, tag = 'internal scratch']
  %s0 = inlined_call_operand.hbm [shape: f32[8,150], index: 0, kind: input, shape index: {}]
  %s1 = inlined_call_operand.hbm [shape: f32[3,150], index: 1, kind: input, shape index: {}]
  %s2 = inlined_call_operand.vmem [shape: f32[1,3], index: 2, kind: input, shape index: {}]
  %s3 = inlined_call_operand.vmem [shape: f32[8,3], index: 3, kind: output, shape index: {}]
  %s4 = sld [smem:[#allocation0]]
  $region30: #{tpu_custom_call.1} parent=0
    _
  %s6 = ssub.s32 1, %s4
  %s7 = scalar_select 0, %s6, %s4
  $region1: #{tpu_custom_call.1} parent=0
    #allocation2 [shape = 'u8[8192]{0}', space=vmem, size = 0x2000, scoped, tag = 'input window, operand 0, single buffered']
    #allocation3 [shape = 's32[1]{0}', space=sflag, size = 0x4, scoped, tag = 'scoped memory for tpu_custom_call.1']
    #allocation4 [shape = 'u8[4096]{0}', space=vmem, size = 0x1000, scoped, tag = 'input window, operand 1, single buffered']
    #allocation5 [shape = 's32[1]{0}', space=sflag, size = 0x4, scoped, tag = 'scoped memory for tpu_custom_call.1']
    %8 = vsyncpa [#allocation3], 0
    %9 = vsyncpa [#allocation5], 0
    // Predicated region
    $region2: #{tpu_custom_call.1} parent=1 // pred_check
      _
    $region3: #{tpu_custom_call.1} parent=1 // pred_check_branch
      %11 = sbr.rel (0) target = $region5
    $region4: #{tpu_custom_call.1} parent=1 // pred_region
      %s13 = ssub.s32 256, 256
      %14 = vsyncadd [#allocation3], %s13
      %s16 = sshll.u32 [#allocation2], 4
      %s17 = int_to_ptr.vmem [resolvable:$true] %s16
      %19 = dma.hbm_to_vmem [thread:$0]  %s0, 256, %s17, [#allocation3]
    $region5: #{tpu_custom_call.1} parent=1 // pred_fallthru
      _
    // Predicated region
    $region6: #{tpu_custom_call.1} parent=1 // pred_check
      _
    $region7: #{tpu_custom_call.1} parent=1 // pred_check_branch
      %21 = sbr.rel (0) target = $region9
    $region8: #{tpu_custom_call.1} parent=1 // pred_region
      %s23 = ssub.s32 128, 128
      %24 = vsyncadd [#allocation5], %s23
      %s26 = sshll.u32 [#allocation4], 4
      %s27 = int_to_ptr.vmem [resolvable:$true] %s26
      %29 = dma.hbm_to_vmem [thread:$0]  %s1, 128, %s27, [#allocation5]
    $region9: #{tpu_custom_call.1} parent=1 // pred_fallthru
      _
    // Predicated region
    $region10: #{tpu_custom_call.1} parent=1 // pred_check
      _
    $region11: #{tpu_custom_call.1} parent=1 // pred_check_branch
      %31 = sbr.rel (0) target = $region13
    $region12: #{tpu_custom_call.1} parent=1 // pred_region
      _
    $region13: #{tpu_custom_call.1} parent=1 // pred_fallthru
      _
    // Predicated region
    $region14: #{tpu_custom_call.1} parent=1 // pred_check
      _
    $region15: #{tpu_custom_call.1} parent=1 // pred_check_branch
      %33 = sbr.rel (0) target = $region17
    $region16: #{tpu_custom_call.1} parent=1 // pred_region
      %34 = dma.done [#allocation3], 256
    $region17: #{tpu_custom_call.1} parent=1 // pred_fallthru
      _
    // Predicated region
    $region18: #{tpu_custom_call.1} parent=1 // pred_check
      _
    $region19: #{tpu_custom_call.1} parent=1 // pred_check_branch
      %36 = sbr.rel (0) target = $region21
    $region20: #{tpu_custom_call.1} parent=1 // pred_region
      %37 = dma.done [#allocation5], 128
    $region21: #{tpu_custom_call.1} parent=1 // pred_fallthru
      _
    %v38 = vld [vmem:[#allocation2] sm:$0xff]
    %v39 = vld [vmem:[#allocation2 + $0x8] sm:$0xff]
    %v40 = vld [vmem:[#allocation4] sm:$0x77]
    %v41 = vld [vmem:[%s2] sm:$0x1]
    %v43 = vlaneseq
    %v44 = vshrl.u32 %v43, 7
    %v45 = vsub.s32 0, %v44
    %v46 = vrot.slane %v41, %v45
    %v49 = vcombine.high %v40, %v40
    %vm50 = vcmask 179200
    %v52 = vsel %vm50, %v39, 0
    %v54 = vsel %vm50, %v49, 0
    %56 = vmatprep.subr.mxu0 %v54
    %57 = vmatpush1.xpose.msra.mxu0 %v40
    %58 = vmatprep.subr.mxu0 0.0
    %59 = vmatpush1.xpose.msra.mxu0 0.0
    %60 = vmatprep.subr.mxu0 0.0
    %61 = vmatpush1.xpose.msra.mxu0 0.0
    %62 = vmatprep.subr.mxu0 0.0
    %63 = vmatpush1.xpose.msra.mxu0 0.0
    %64 = vmatprep.subr.mxu0 0.0
    %65 = vmatpush1.xpose.msra.mxu0 0.0
    %66 = vmatprep.subr.mxu0 0.0
    %67 = vmatpush1.xpose.msra.mxu0 0.0
    %68 = vmatprep.subr.mxu0 0.0
    %69 = vmatpush1.xpose.msra.mxu0 0.0
    %70 = vmatprep.subr.mxu0 0.0
    %71 = vmatpush1.xpose.msra.mxu0 0.0
    %72 = vmatprep.subr.mxu0 0.0
    %73 = vmatpush1.xpose.msra.mxu0 0.0
    %74 = vmatprep.subr.mxu0 0.0
    %75 = vmatpush1.xpose.msra.mxu0 0.0
    %76 = vmatprep.subr.mxu0 0.0
    %77 = vmatpush1.xpose.msra.mxu0 0.0
    %78 = vmatprep.subr.mxu0 0.0
    %79 = vmatpush1.xpose.msra.mxu0 0.0
    %80 = vmatprep.subr.mxu0 0.0
    %81 = vmatpush1.xpose.msra.mxu0 0.0
    %82 = vmatprep.subr.mxu0 0.0
    %83 = vmatpush1.xpose.msra.mxu0 0.0
    %84 = vmatprep.subr.mxu0 0.0
    %85 = vmatpush1.xpose.msra.mxu0 0.0
    %86 = vmatprep.subr.mxu0 0.0
    %87 = vmatpush1.xpose.msra.mxu0 0.0
    %88 = vmatprep.subr.mxu0 0.0
    %89 = vmatpush1.xpose.msra.mxu0 0.0
    %90 = vmatprep.subr.mxu0 0.0
    %91 = vmatpush1.xpose.msra.mxu0 0.0
    %92 = vmatprep.subr.mxu0 0.0
    %93 = vmatpush1.xpose.msra.mxu0 0.0
    %94 = vmatprep.subr.mxu0 0.0
    %95 = vmatpush1.xpose.msra.mxu0 0.0
    %96 = vmatprep.subr.mxu0 0.0
    %97 = vmatpush1.xpose.msra.mxu0 0.0
    %98 = vmatprep.subr.mxu0 0.0
    %99 = vmatpush1.xpose.msra.mxu0 0.0
    %100 = vmatprep.subr.mxu0 0.0
    %101 = vmatpush1.xpose.msra.mxu0 0.0
    %102 = vmatprep.subr.mxu0 0.0
    %103 = vmatpush1.xpose.msra.mxu0 0.0
    %104 = vmatprep.subr.mxu0 0.0
    %105 = vmatpush1.xpose.msra.mxu0 0.0
    %106 = vmatprep.subr.mxu0 0.0
    %107 = vmatpush1.xpose.msra.mxu0 0.0
    %108 = vmatprep.subr.mxu0 0.0
    %109 = vmatpush1.xpose.msra.mxu0 0.0
    %110 = vmatprep.subr.mxu0 0.0
    %111 = vmatpush1.xpose.msra.mxu0 0.0
    %112 = vmatprep.subr.mxu0 0.0
    %113 = vmatpush1.xpose.msra.mxu0 0.0
    %114 = vmatprep.subr.mxu0 0.0
    %115 = vmatpush1.xpose.msra.mxu0 0.0
    %116 = vmatprep.subr.mxu0 0.0
    %117 = vmatpush1.xpose.msra.mxu0 0.0
    %118 = vmatprep.subr.mxu0 0.0
    %119 = vmatpush1.xpose.msra.mxu0 0.0
    %120 = vmatprep.mubr.f32.mxu0 %v52
    %121 = vmatmul.mubr.f32.gmra.mrb[0].mxu0 %v38
    %v122 = vpop.f32.mrb[0].mxu0
    %v123 = vadd.f32 %v46, %v122
    %v124 = vpop.f32.mrb[0].mxu0
    %125 = vdwg.mxu0
    %vm126 = vcmask 23552
    %127 = vst.msk [vmem:[%s3] sm:$0xff] %vm126, %v123
    // Predicated region
    $region22: #{tpu_custom_call.1} parent=1 // pred_check
      _
    $region23: #{tpu_custom_call.1} parent=1 // pred_check_branch
      %129 = sbr.rel (0) target = $region25
    $region24: #{tpu_custom_call.1} parent=1 // pred_region
      _
    $region25: #{tpu_custom_call.1} parent=1 // pred_fallthru
      _
    // Predicated region
    $region26: #{tpu_custom_call.1} parent=1 // pred_check
      _
    $region27: #{tpu_custom_call.1} parent=1 // pred_check_branch
      %131 = sbr.rel (0) target = $region29
    $region28: #{tpu_custom_call.1} parent=1 // pred_region
      _
    $region29: #{tpu_custom_call.1} parent=1 // pred_fallthru
      _
    %132 = vsyncpa [#allocation3], 1
    %133 = vsyncpa [#allocation5], 1

</llo_original>
